<compile_context>
chip_gen: v7x
topology: tpu7x:2x2x1
jax: 0.10.0
libtpu: 0.0.40
codegen_flags: <defaults>
</compile_context>

<pallas_src>
import functools

import jax
import jax.numpy as jnp
from jax import lax
from jax.experimental import pallas as pl
from jax.experimental.pallas import tpu as pltpu

LANES = 128
MAX_TILE_ROWS = 1024  # 1024 x 128 f32 = 512 KiB per pipeline buffer


def _counter_normal(seed_i32, pid, tile_rows, shape):
    """N(0,1) noise from a counter-based hash + Box-Muller (plain jnp ops).

    Only used on non-TPU backends (interpret mode) where the Mosaic hardware
    PRNG primitives are unavailable; on TPU the hardware PRNG path is taken.
    """
    row = lax.broadcasted_iota(jnp.uint32, shape, 0)
    col = lax.broadcasted_iota(jnp.uint32, shape, 1)
    pid_u = pid.astype(jnp.uint32)
    ctr = (pid_u * jnp.uint32(tile_rows) + row) * jnp.uint32(LANES) + col

    def mix(x):  # lowbias32-style 32-bit finalizer
        x = (x ^ (x >> 16)) * jnp.uint32(0x7FEB352D)
        x = (x ^ (x >> 15)) * jnp.uint32(0x846CA68B)
        return x ^ (x >> 16)

    base = ctr * jnp.uint32(2654435761) + seed_i32.astype(jnp.uint32)
    b1 = mix(base)
    b2 = mix(base ^ jnp.uint32(0x68BC21EB))
    # 24-bit uniforms; u1 strictly in (0, 1) so log() is finite.
    u1 = (b1 >> 8).astype(jnp.float32) * (1.0 / (1 << 24)) + 0.5 / (1 << 24)
    u2 = (b2 >> 8).astype(jnp.float32) * (1.0 / (1 << 24))
    r = jnp.sqrt(-2.0 * jnp.log(u1))
    return r * jnp.cos((2.0 * jnp.pi) * u2)


def _gaussian_noise_kernel(seed_ref, x_ref, o_ref, *, mean, sigma,
                           use_hw_prng, tile_rows):
    pid = pl.program_id(0)
    if use_hw_prng:
        # Per-tile seed (user seed, grid step): each tile draws independent
        # noise and the grid axis is safe to shard across TensorCores.
        pltpu.prng_seed(seed_ref[0], pid)
        z = pltpu.stateful_normal(x_ref.shape, jnp.float32)
    else:
        z = _counter_normal(seed_ref[0], pid, tile_rows, x_ref.shape)

    noise = z * sigma
    if mean != 0.0:  # trace-time fold: skip the add in the common mean=0 case
        noise = noise + mean
    # TODO(synk): for bf16 inputs on v6e/v7x the noise could be generated and
    # added in bf16 to halve vreg traffic (not on v5e: no bf16 VPU/EUP).
    o_ref[...] = (x_ref[...].astype(jnp.float32) + noise).astype(o_ref.dtype)


def gaussian_noise(x, seed, *, mean=0.0, sigma=0.05, training=True,
                   donate_input=False):
    """out = x + N(mean, sigma) noise when training, identity in eval."""
    if not training:
        return x

    orig_shape = x.shape
    orig_dtype = x.dtype

    flat = x.reshape(-1)
    n = flat.shape[0]
    # Lane-dense layout: (rows, 128). Conv activations are almost always a
    # multiple of 128 elements, so the pad branch is normally a no-op.
    n_pad = (-n) % LANES
    if n_pad:
        # TODO(synk): ragged sizes pay one extra pad/slice HBM pass; a tiny
        # scalar tail handled outside the kernel would avoid it.
        flat = jnp.pad(flat, (0, n_pad))
    rows = flat.shape[0] // LANES
    x2d = flat.reshape(rows, LANES)

    tile_rows = min(MAX_TILE_ROWS, rows)
    grid = (pl.cdiv(rows, tile_rows),)

    use_hw_prng = jax.default_backend() == "tpu"

    kernel = functools.partial(
        _gaussian_noise_kernel,
        mean=float(mean),
        sigma=float(sigma),
        use_hw_prng=use_hw_prng,
        tile_rows=tile_rows,
    )

    seed_arr = jnp.asarray([seed], dtype=jnp.int32)

    out2d = pl.pallas_call(
        kernel,
        out_shape=jax.ShapeDtypeStruct((rows, LANES), orig_dtype),
        grid_spec=pltpu.PrefetchScalarGridSpec(
            num_scalar_prefetch=1,  # seed -> SMEM
            grid=grid,
            in_specs=[pl.BlockSpec((tile_rows, LANES), lambda i, seed: (i, 0))],
            out_specs=pl.BlockSpec((tile_rows, LANES), lambda i, seed: (i, 0)),
        ),
        compiler_params=pltpu.CompilerParams(
            dimension_semantics=("parallel",),
        ),
        # Optional HBM-footprint saving: reuse x's buffer for the output
        # (input index 1 = x2d, output index 0). Off by default so callers
        # that still need x (e.g. residual paths) are unaffected.
        input_output_aliases=({1: 0} if donate_input else {}),
    )(seed_arr, x2d)

    out_flat = out2d.reshape(-1)
    if n_pad:
        out_flat = out_flat[:n]
    return out_flat.reshape(orig_shape)


if __name__ == "__main__":
    # GaussianNoise has no learned parameters; mean/sigma are hyperparameters.
    mean, sigma = 0.0, 0.05

    key = jax.random.PRNGKey(0)
    x = jax.random.normal(key, (2, 4, 16, 16), dtype=jnp.float32)  # NCHW

    # Training mode: noise is generated and added inside the Pallas kernel.
    y = gaussian_noise(x, seed=1234, mean=mean, sigma=sigma, training=True)
    y = jax.block_until_ready(y)

    # Eval mode: identity pass-through.
    y_eval = gaussian_noise(x, seed=1234, mean=mean, sigma=sigma, training=False)
    y_eval = jax.block_until_ready(y_eval)

    assert y.shape == x.shape and y.dtype == x.dtype
    assert bool(jnp.all(jnp.isfinite(y)))
    assert bool(jnp.array_equal(y_eval, x))

    # Sanity-check noise statistics: (y - x) should be ~N(mean, sigma).
    noise = (y - x).reshape(-1)
    noise_mean = float(jnp.mean(noise))
    noise_std = float(jnp.std(noise))
    assert abs(noise_mean - mean) < 1e-2, noise_mean
    assert abs(noise_std - sigma) < 1.5e-2, noise_std

    print("KERNEL_OK")
</pallas_src>

<mosaic_0001>
module attributes {stable_mosaic.version = 11 : i64} {
  func.func @_gaussian_noise_kernel(%arg0: i32, %arg1: memref<1xi32, #tpu.memory_space<smem>>, %arg2: memref<16x128xf32, #tpu.memory_space<vmem>>, %arg3: memref<16x128xf32, #tpu.memory_space<vmem>>) attributes {dimension_semantics = [#tpu.dimension_semantics<parallel>], iteration_bounds = array<i64: 1>, scalar_prefetch = 1 : i64, scratch_operands = 0 : i64, tpu.core_type = #tpu.core_type<tc>, window_params = [{transform_indices = @transform_0, window_bounds = array<i64: 16, 128>}, {transform_indices = @transform_1, window_bounds = array<i64: 16, 128>}]} {
    %c0 = arith.constant 0 : index
    %0 = memref.load %arg1[%c0] : memref<1xi32, #tpu.memory_space<smem>>
    %1 = tpu.iota {dimensions = array<i32: 0>} : vector<16x128xi32>
    %2 = tpu.iota {dimensions = array<i32: 1>} : vector<16x128xi32>
    %c16_i32 = arith.constant 16 : i32
    %3 = arith.muli %arg0, %c16_i32 : i32
    %4 = vector.broadcast %3 : i32 to vector<16x128xi32>
    %5 = arith.addi %4, %1 : vector<16x128xi32>
    %c128_i32 = arith.constant 128 : i32
    %6 = vector.broadcast %c128_i32 : i32 to vector<16x128xi32>
    %7 = arith.muli %5, %6 : vector<16x128xi32>
    %8 = arith.addi %7, %2 : vector<16x128xi32>
    %c-1640531535_i32 = arith.constant -1640531535 : i32
    %9 = vector.broadcast %c-1640531535_i32 : i32 to vector<16x128xi32>
    %10 = arith.muli %8, %9 : vector<16x128xi32>
    %11 = vector.broadcast %0 : i32 to vector<16x128xi32>
    %12 = arith.addi %10, %11 : vector<16x128xi32>
    %c16_i32_0 = arith.constant 16 : i32
    %13 = vector.broadcast %c16_i32_0 : i32 to vector<16x128xi32>
    %14 = arith.shrui %12, %13 : vector<16x128xi32>
    %15 = arith.xori %12, %14 : vector<16x128xi32>
    %c2146121005_i32 = arith.constant 2146121005 : i32
    %16 = vector.broadcast %c2146121005_i32 : i32 to vector<16x128xi32>
    %17 = arith.muli %15, %16 : vector<16x128xi32>
    %c15_i32 = arith.constant 15 : i32
    %18 = vector.broadcast %c15_i32 : i32 to vector<16x128xi32>
    %19 = arith.shrui %17, %18 : vector<16x128xi32>
    %20 = arith.xori %17, %19 : vector<16x128xi32>
    %c-2073254261_i32 = arith.constant -2073254261 : i32
    %21 = vector.broadcast %c-2073254261_i32 : i32 to vector<16x128xi32>
    %22 = arith.muli %20, %21 : vector<16x128xi32>
    %c16_i32_1 = arith.constant 16 : i32
    %23 = vector.broadcast %c16_i32_1 : i32 to vector<16x128xi32>
    %24 = arith.shrui %22, %23 : vector<16x128xi32>
    %25 = arith.xori %22, %24 : vector<16x128xi32>
    %c1757159915_i32 = arith.constant 1757159915 : i32
    %26 = vector.broadcast %c1757159915_i32 : i32 to vector<16x128xi32>
    %27 = arith.xori %12, %26 : vector<16x128xi32>
    %c16_i32_2 = arith.constant 16 : i32
    %28 = vector.broadcast %c16_i32_2 : i32 to vector<16x128xi32>
    %29 = arith.shrui %27, %28 : vector<16x128xi32>
    %30 = arith.xori %27, %29 : vector<16x128xi32>
    %c2146121005_i32_3 = arith.constant 2146121005 : i32
    %31 = vector.broadcast %c2146121005_i32_3 : i32 to vector<16x128xi32>
    %32 = arith.muli %30, %31 : vector<16x128xi32>
    %c15_i32_4 = arith.constant 15 : i32
    %33 = vector.broadcast %c15_i32_4 : i32 to vector<16x128xi32>
    %34 = arith.shrui %32, %33 : vector<16x128xi32>
    %35 = arith.xori %32, %34 : vector<16x128xi32>
    %c-2073254261_i32_5 = arith.constant -2073254261 : i32
    %36 = vector.broadcast %c-2073254261_i32_5 : i32 to vector<16x128xi32>
    %37 = arith.muli %35, %36 : vector<16x128xi32>
    %c16_i32_6 = arith.constant 16 : i32
    %38 = vector.broadcast %c16_i32_6 : i32 to vector<16x128xi32>
    %39 = arith.shrui %37, %38 : vector<16x128xi32>
    %40 = arith.xori %37, %39 : vector<16x128xi32>
    %c8_i32 = arith.constant 8 : i32
    %41 = vector.broadcast %c8_i32 : i32 to vector<16x128xi32>
    %42 = arith.shrui %25, %41 : vector<16x128xi32>
    %43 = arith.uitofp %42 : vector<16x128xi32> to vector<16x128xf32>
    %cst = arith.constant 5.96046448E-8 : f32
    %44 = vector.broadcast %cst : f32 to vector<16x128xf32>
    %45 = arith.mulf %43, %44 : vector<16x128xf32>
    %cst_7 = arith.constant 2.98023224E-8 : f32
    %46 = vector.broadcast %cst_7 : f32 to vector<16x128xf32>
    %47 = arith.addf %45, %46 : vector<16x128xf32>
    %c8_i32_8 = arith.constant 8 : i32
    %48 = vector.broadcast %c8_i32_8 : i32 to vector<16x128xi32>
    %49 = arith.shrui %40, %48 : vector<16x128xi32>
    %50 = arith.uitofp %49 : vector<16x128xi32> to vector<16x128xf32>
    %cst_9 = arith.constant 5.96046448E-8 : f32
    %51 = vector.broadcast %cst_9 : f32 to vector<16x128xf32>
    %52 = arith.mulf %50, %51 : vector<16x128xf32>
    %53 = math.log %47 : vector<16x128xf32>
    %cst_10 = arith.constant -2.000000e+00 : f32
    %54 = vector.broadcast %cst_10 : f32 to vector<16x128xf32>
    %55 = arith.mulf %54, %53 : vector<16x128xf32>
    %56 = math.sqrt %55 : vector<16x128xf32>
    %cst_11 = arith.constant 6.28318548 : f32
    %57 = vector.broadcast %cst_11 : f32 to vector<16x128xf32>
    %58 = arith.mulf %57, %52 : vector<16x128xf32>
    %59 = math.cos %58 : vector<16x128xf32>
    %60 = arith.mulf %56, %59 : vector<16x128xf32>
    %cst_12 = arith.constant 5.000000e-02 : f32
    %61 = vector.broadcast %cst_12 : f32 to vector<16x128xf32>
    %62 = arith.mulf %60, %61 : vector<16x128xf32>
    %c0_13 = arith.constant 0 : index
    %c0_14 = arith.constant 0 : index
    %63 = vector.load %arg2[%c0_13, %c0_14] : memref<16x128xf32, #tpu.memory_space<vmem>>, vector<16x128xf32>
    %64 = arith.addf %63, %62 : vector<16x128xf32>
    %c0_15 = arith.constant 0 : index
    %c0_16 = arith.constant 0 : index
    %65 = vector.load %arg3[%c0_15, %c0_16] : memref<16x128xf32, #tpu.memory_space<vmem>>, vector<16x128xf32>
    tpu.vector_store %arg3[%c0_15, %c0_16], %64 {strides = array<i32>} : memref<16x128xf32, #tpu.memory_space<vmem>>, vector<16x128xf32>,
    return
  }
  func.func @transform_0(%arg0: i32, %arg1: memref<1xi32, #tpu.memory_space<smem>>) -> (i32, i32) {
    %c0_i32 = arith.constant 0 : i32
    %c0_i32_0 = arith.constant 0 : i32
    return %arg0, %c0_i32 : i32, i32
  }
  func.func @transform_1(%arg0: i32, %arg1: memref<1xi32, #tpu.memory_space<smem>>) -> (i32, i32) {
    %c0_i32 = arith.constant 0 : i32
    %c0_i32_0 = arith.constant 0 : i32
    return %arg0, %c0_i32 : i32, i32
  }
}

</mosaic_0001>

<llo_original>
// kernel: tpu_custom_call.1
$region0: #{tpu_custom_call.1}
  #allocation0 [shape = 'u32[]', space=smem, size = 0x4, offset = 0x4, fixed_abs, tag = 'smem constant byte address 0x4 - core index']
  #allocation1 [shape = 'u32[144,128]{1,0:T(1,128)}', space=vmem, size = 0x12000, scoped, tag = 'internal scratch']
  #allocation2 [shape = 's32[1]{0}', space=sflag, size = 0x4, scoped, tag = 'scoped memory for tpu_custom_call.1']
  #allocation3 [shape = 's32[1]{0:T(128)S(6)}', space=smem, size = 0x200, scoped, tag = 'prefetched SMEM operand 0']
  %s0 = inlined_call_operand.<no memory space> [shape: s32[1], index: 0, kind: input, shape index: {}]
  %s1 = inlined_call_operand.hbm [shape: f32[16,128], index: 1, kind: input, shape index: {}]
  %s2 = inlined_call_operand.hbm [shape: f32[16,128], index: 2, kind: output, shape index: {}]
  %s3 = sld [smem:[#allocation0]]
  $region18: #{tpu_custom_call.1} parent=0
    _
  %s5 = ssub.s32 1, %s3
  %s6 = scalar_select 0, %s5, %s3
  %7 = sst [smem:[#allocation3]] %s0
  $region1: #{tpu_custom_call.1} parent=0
    #allocation4 [shape = 'u8[8192]{0}', space=vmem, size = 0x2000, scoped, tag = 'input window, operand 1, single buffered']
    #allocation5 [shape = 's32[1]{0}', space=sflag, size = 0x4, scoped, tag = 'scoped memory for tpu_custom_call.1']
    #allocation6 [shape = 's32[1]{0}', space=sflag, size = 0x4, scoped, tag = 'scoped memory for tpu_custom_call.1']
    #allocation7 [shape = 'u8[8192]{0}', space=vmem, size = 0x2000, scoped, tag = 'output window, operand 0, single buffered']
    %8 = vsyncpa [#allocation5], 0
    %9 = vsyncpa [#allocation6], 0
    // Predicated region
    $region2: #{tpu_custom_call.1} parent=1 // pred_check
      _
    $region3: #{tpu_custom_call.1} parent=1 // pred_check_branch
      %11 = sbr.rel (0) target = $region5
    $region4: #{tpu_custom_call.1} parent=1 // pred_region
      %s13 = ssub.s32 256, 256
      %14 = vsyncadd [#allocation5], %s13
      %s15 = sshll.u32 [#allocation4], 4
      %s16 = int_to_ptr.vmem [resolvable:$true] %s15
      %21 = dma.hbm_to_vmem [thread:$0]  %s1, 256, %s16, [#allocation5], 128, 128, 8
    $region5: #{tpu_custom_call.1} parent=1 // pred_fallthru
      _
    // Predicated region
    $region6: #{tpu_custom_call.1} parent=1 // pred_check
      _
    $region7: #{tpu_custom_call.1} parent=1 // pred_check_branch
      %23 = sbr.rel (0) target = $region9
    $region8: #{tpu_custom_call.1} parent=1 // pred_region
      %24 = dma.done [#allocation5], 256
    $region9: #{tpu_custom_call.1} parent=1 // pred_fallthru
      _
    %s25 = sld [smem:[#allocation3]]
    %v26 = vlaneseq
    %v27 = vshrl.u32 %v26, 7
    %v28 = vadd.s32 %v27, 8
    %v29 = vlaneseq
    %v30 = vand.u32 %v29, 127
    %s31 = smul.u32 0, 16
    %v32 = vstv %s31
    %v33 = vadd.s32 %v32, %v27
    %v34 = vadd.s32 %v32, %v28
    %v35 = vmul.u32 %v33, 128
    %v36 = vmul.u32 %v34, 128
    %v37 = vadd.s32 %v35, %v30
    %v38 = vadd.s32 %v36, %v30
    %v39 = vmul.u32 %v37, 2654435761
    %v40 = vmul.u32 %v38, 2654435761
    %v41 = vstv %s25
    %v42 = vadd.s32 %v39, %v41
    %v43 = vadd.s32 %v40, %v41
    %v44 = vshrl.u32 %v42, 16
    %v45 = vshrl.u32 %v43, 16
    %v46 = vxor.u32 %v42, %v44
    %v47 = vxor.u32 %v43, %v45
    %v48 = vmul.u32 %v46, 2146121005
    %v49 = vmul.u32 %v47, 2146121005
    %v50 = vshrl.u32 %v48, 15
    %v51 = vshrl.u32 %v49, 15
    %v52 = vxor.u32 %v48, %v50
    %v53 = vxor.u32 %v49, %v51
    %v54 = vmul.u32 %v52, 2221713035
    %v55 = vmul.u32 %v53, 2221713035
    %v56 = vshrl.u32 %v54, 16
    %v57 = vshrl.u32 %v55, 16
    %v58 = vxor.u32 %v54, %v56
    %v59 = vxor.u32 %v55, %v57
    %v60 = vxor.u32 %v42, 1757159915
    %v61 = vxor.u32 %v43, 1757159915
    %v62 = vshrl.u32 %v60, 16
    %v63 = vshrl.u32 %v61, 16
    %v64 = vxor.u32 %v60, %v62
    %v65 = vxor.u32 %v61, %v63
    %v66 = vmul.u32 %v64, 2146121005
    %v67 = vmul.u32 %v65, 2146121005
    %v68 = vshrl.u32 %v66, 15
    %v69 = vshrl.u32 %v67, 15
    %v70 = vxor.u32 %v66, %v68
    %v71 = vxor.u32 %v67, %v69
    %v72 = vmul.u32 %v70, 2221713035
    %v73 = vmul.u32 %v71, 2221713035
    %v74 = vshrl.u32 %v72, 16
    %v75 = vshrl.u32 %v73, 16
    %v76 = vxor.u32 %v72, %v74
    %v77 = vxor.u32 %v73, %v75
    %v78 = vshrl.u32 %v58, 8
    %v79 = vshrl.u32 %v59, 8
    %v80 = vshrl.u32 %v78, 16
    %v81 = vand.u32 %v78, 65535
    %v82 = vcvt.s32.f32 %v80
    %v83 = vmul.f32 %v82, 65536.0
    %v84 = vcvt.s32.f32 %v81
    %v85 = vadd.f32 %v83, %v84
    %v86 = vshrl.u32 %v79, 16
    %v87 = vand.u32 %v79, 65535
    %v88 = vcvt.s32.f32 %v86
    %v89 = vmul.f32 %v88, 65536.0
    %v90 = vcvt.s32.f32 %v87
    %v91 = vadd.f32 %v89, %v90
    %v92 = vmul.f32 %v85, 5.9604645e-08
    %v93 = vmul.f32 %v91, 5.9604645e-08
    %v94 = vadd.f32 %v92, 2.9802322e-08
    %v95 = vadd.f32 %v93, 2.9802322e-08
    %v96 = vshrl.u32 %v76, 8
    %v97 = vshrl.u32 %v77, 8
    %v98 = vshrl.u32 %v96, 16
    %v99 = vand.u32 %v96, 65535
    %v100 = vcvt.s32.f32 %v98
    %v101 = vmul.f32 %v100, 65536.0
    %v102 = vcvt.s32.f32 %v99
    %v103 = vadd.f32 %v101, %v102
    %v104 = vshrl.u32 %v97, 16
    %v105 = vand.u32 %v97, 65535
    %v106 = vcvt.s32.f32 %v104
    %v107 = vmul.f32 %v106, 65536.0
    %v108 = vcvt.s32.f32 %v105
    %v109 = vadd.f32 %v107, %v108
    %v110 = vmul.f32 %v103, 5.9604645e-08
    %v111 = vmul.f32 %v109, 5.9604645e-08
    %v112 = vlog2.pop %v94
    %v113 = vmul.f32 %v112, 0.6931472
    %v114 = vlog2.pop %v95
    %v115 = vmul.f32 %v114, 0.6931472
    %v116 = vmul.f32 %v113, -2.0
    %v117 = vmul.f32 %v115, -2.0
    %v118 = vrsqrt.pop %v116
    %v119 = vmul.f32 %v116, %v118
    %vm120 = vcmp.eq.f32.partialorder %v116, inf
    %v121 = vsel %vm120, %v116, %v119
    %vm122 = vcmp.eq.f32.partialorder %v116, 0.0
    %v123 = vand.u32 %v116, 2147483648
    %v124 = vsel %vm122, %v123, %v121
    %v125 = vrsqrt.pop %v117
    %v126 = vmul.f32 %v117, %v125
    %vm127 = vcmp.eq.f32.partialorder %v117, inf
    %v128 = vsel %vm127, %v117, %v126
    %vm129 = vcmp.eq.f32.partialorder %v117, 0.0
    %v130 = vand.u32 %v117, 2147483648
    %v131 = vsel %vm129, %v130, %v128
    %v132 = vmul.f32 %v110, 6.2831855
    %v133 = vmul.f32 %v111, 6.2831855
    %v134 = vand.u32 2147483647, %v132
    %vm135 = vcmp.le.f32.partialorder %v134, 0.7853982
    %vm136 = vcmp.lt.s32.totalorder %v132, 0
    %v137 = vand.u32 %v132, 2139095040
    %v138 = vshrl.u32 %v137, 23
    %v139 = vsub.s32 %v138, 127
    %v140 = vand.u32 2147483647, %v132
    %v141 = vand.u32 %v140, 8388607
    %v142 = vor.u32 %v141, 8388608
    %v143 = vsub.s32 0, %v142
    %v144 = vadd.s32 %v139, 1
    %vm145 = vcmp.gt.s32.totalorder %v144, 0
    %v146 = vsel %vm145, %v144, 0
    %v147 = vshrl.u32 %v146, 5
    %v148 = vand.u32 %v146, 31
    %v149 = vsub.s32 32, %v148
    %v150 = vshrl.u32 683565275, %v149
    %v151 = vshll.u32 683565275, %v148
    %v152 = vshrl.u32 2475754826, %v149
    %v153 = vor.u32 %v151, %v152
    %v154 = vshll.u32 2475754826, %v148
    %v155 = vshrl.u32 2131351028, %v149
    %v156 = vor.u32 %v154, %v155
    %v157 = vshll.u32 2131351028, %v148
    %v158 = vshrl.u32 2102212464, %v149
    %v159 = vor.u32 %v157, %v158
    %v160 = vshll.u32 2102212464, %v148
    %v161 = vshrl.u32 920167782, %v149
    %v162 = vor.u32 %v160, %v161
    %v163 = vshll.u32 920167782, %v148
    %v164 = vshrl.u32 1326507024, %v149
    %v165 = vor.u32 %v163, %v164
    %vm166 = vcmp.lt.s32.totalorder %v147, 1
    %vm167 = vcmp.lt.s32.totalorder %v147, 2
    %vm168 = vcmp.lt.s32.totalorder %v147, 3
    %vm169 = vcmp.lt.s32.totalorder %v147, 4
    %v170 = vsel %vm166, %v150, %v153
    %v171 = vsel %vm169, %v159, 2102212464
    %v172 = vsel %vm168, %v156, %v171
    %v173 = vsel %vm167, %v170, %v172
    %v174 = vsel %vm166, %v153, %v156
    %v175 = vsel %vm169, %v162, 920167782
    %v176 = vsel %vm168, %v159, %v175
    %v177 = vsel %vm167, %v174, %v176
    %v178 = vsel %vm166, %v156, %v159
    %v179 = vsel %vm169, %v165, 1326507024
    %v180 = vsel %vm168, %v162, %v179
    %v181 = vsel %vm167, %v178, %v180
    %v182 = vshll.u32 %v142, 8
    %v183 = vmul.u32.u64.compose %v182, %v181
    %v184 = vextract.low.u32 %v183
    %v185 = vextract.high.u32 %v183
    %v186 = vmul.u32.u64.compose %v182, %v177
    %v187 = vextract.low.u32 %v186
    %v188 = vextract.high.u32 %v186
    %v189 = vmul.u32 %v182, %v173
    %v190 = vadd.s32 %v185, %v187
    %vm191 = vc.u32 %v185, %v187
    %v192 = vadd.s32 %v188, 1
    %v193 = vsel %vm191, %v192, %v188
    %v194 = vadd.s32 %v189, %v193
    %v195 = vadd.s32 %v194, 536870912
    %v196 = vshrl.u32 %v195, 30
    %v197 = vshll.u32 %v196, 30
    %v198 = vsub.s32 %v194, %v197
    %vm199 = vcmp.lt.s32.totalorder %v198, 0
    %v200 = vsub.s32 0, %v198
    %v201 = vsel %vm199, %v200, %v198
    %v202 = vclz %v201
    %v203 = vsub.s32 %v202, 2
    %vm204 = vcmp.gt.s32.totalorder 0, %v203
    %v205 = vsel %vm204, 0, %v203
    %v206 = vsub.s32 32, %v205
    %v207 = vshll.u32 %v198, %v205
    %v208 = vshrl.u32 %v190, %v206
    %v209 = vor.u32 %v207, %v208
    %v210 = vsub.s32 4294967266, %v205
    %v211 = vadd.s32 %v210, 127
    %v212 = vshll.u32 %v211, 23
    %v213 = vor.u32 4788187, %v212
    %v214 = vand.u32 2147483647, %v213
    %v216 = vcvt.s32.f32 %v209
    %v217 = vmul.f32 %v216, %v214
    %v218 = vxor.u32 %v217, 2147483648
    %v219 = vsel %vm136, %v218, %v217
    %v220 = vsub.s32 4, %v196
    %v221 = vsel %vm136, %v220, %v196
    %v222 = vsel %vm135, %v132, %v219
    %v223 = vsel %vm135, 0, %v221
    %v224 = vcosq.f32.pop %v222
    %v225 = vsinq.f32.pop %v222
    %vm226 = vweird.f32 %v132
    %v227 = vand.u32 %v223, 3
    %vm228 = vcmp.lt.s32.totalorder %v227, 2
    %vm229 = vcmp.eq.s32.totalorder %v227, 0
    %v230 = vxor.u32 %v225, 2147483648
    %v231 = vsel %vm229, %v224, %v230
    %vm232 = vcmp.eq.s32.totalorder %v227, 2
    %v233 = vxor.u32 %v224, 2147483648
    %v234 = vsel %vm232, %v233, %v225
    %v235 = vsel %vm228, %v231, %v234
    %v236 = vsel %vm226, nan, %v235
    %v237 = vand.u32 2147483647, %v133
    %vm238 = vcmp.le.f32.partialorder %v237, 0.7853982
    %vm239 = vcmp.lt.s32.totalorder %v133, 0
    %v240 = vand.u32 %v133, 2139095040
    %v241 = vshrl.u32 %v240, 23
    %v242 = vsub.s32 %v241, 127
    %v243 = vand.u32 2147483647, %v133
    %v244 = vand.u32 %v243, 8388607
    %v245 = vor.u32 %v244, 8388608
    %v246 = vsub.s32 0, %v245
    %v247 = vadd.s32 %v242, 1
    %vm248 = vcmp.gt.s32.totalorder %v247, 0
    %v249 = vsel %vm248, %v247, 0
    %v250 = vshrl.u32 %v249, 5
    %v251 = vand.u32 %v249, 31
    %v252 = vsub.s32 32, %v251
    %v253 = vshrl.u32 683565275, %v252
    %v254 = vshll.u32 683565275, %v251
    %v255 = vshrl.u32 2475754826, %v252
    %v256 = vor.u32 %v254, %v255
    %v257 = vshll.u32 2475754826, %v251
    %v258 = vshrl.u32 2131351028, %v252
    %v259 = vor.u32 %v257, %v258
    %v260 = vshll.u32 2131351028, %v251
    %v261 = vshrl.u32 2102212464, %v252
    %v262 = vor.u32 %v260, %v261
    %v263 = vshll.u32 2102212464, %v251
    %v264 = vshrl.u32 920167782, %v252
    %v265 = vor.u32 %v263, %v264
    %v266 = vshll.u32 920167782, %v251
    %v267 = vshrl.u32 1326507024, %v252
    %v268 = vor.u32 %v266, %v267
    %vm269 = vcmp.lt.s32.totalorder %v250, 1
    %vm270 = vcmp.lt.s32.totalorder %v250, 2
    %vm271 = vcmp.lt.s32.totalorder %v250, 3
    %vm272 = vcmp.lt.s32.totalorder %v250, 4
    %v273 = vsel %vm269, %v253, %v256
    %v274 = vsel %vm272, %v262, 2102212464
    %v275 = vsel %vm271, %v259, %v274
    %v276 = vsel %vm270, %v273, %v275
    %v277 = vsel %vm269, %v256, %v259
    %v278 = vsel %vm272, %v265, 920167782
    %v279 = vsel %vm271, %v262, %v278
    %v280 = vsel %vm270, %v277, %v279
    %v281 = vsel %vm269, %v259, %v262
    %v282 = vsel %vm272, %v268, 1326507024
    %v283 = vsel %vm271, %v265, %v282
    %v284 = vsel %vm270, %v281, %v283
    %v285 = vshll.u32 %v245, 8
    %v286 = vmul.u32.u64.compose %v285, %v284
    %v287 = vextract.low.u32 %v286
    %v288 = vextract.high.u32 %v286
    %v289 = vmul.u32.u64.compose %v285, %v280
    %v290 = vextract.low.u32 %v289
    %v291 = vextract.high.u32 %v289
    %v292 = vmul.u32 %v285, %v276
    %v293 = vadd.s32 %v288, %v290
    %vm294 = vc.u32 %v288, %v290
    %v295 = vadd.s32 %v291, 1
    %v296 = vsel %vm294, %v295, %v291
    %v297 = vadd.s32 %v292, %v296
    %v298 = vadd.s32 %v297, 536870912
    %v299 = vshrl.u32 %v298, 30
    %v300 = vshll.u32 %v299, 30
    %v301 = vsub.s32 %v297, %v300
    %vm302 = vcmp.lt.s32.totalorder %v301, 0
    %v303 = vsub.s32 0, %v301
    %v304 = vsel %vm302, %v303, %v301
    %v305 = vclz %v304
    %v306 = vsub.s32 %v305, 2
    %vm307 = vcmp.gt.s32.totalorder 0, %v306
    %v308 = vsel %vm307, 0, %v306
    %v309 = vsub.s32 32, %v308
    %v310 = vshll.u32 %v301, %v308
    %v311 = vshrl.u32 %v293, %v309
    %v312 = vor.u32 %v310, %v311
    %v313 = vsub.s32 4294967266, %v308
    %v314 = vadd.s32 %v313, 127
    %v315 = vshll.u32 %v314, 23
    %v316 = vor.u32 4788187, %v315
    %v317 = vand.u32 2147483647, %v316
    %v319 = vcvt.s32.f32 %v312
    %v320 = vmul.f32 %v319, %v317
    %v321 = vxor.u32 %v320, 2147483648
    %v322 = vsel %vm239, %v321, %v320
    %v323 = vsub.s32 4, %v299
    %v324 = vsel %vm239, %v323, %v299
    %v325 = vsel %vm238, %v133, %v322
    %v326 = vsel %vm238, 0, %v324
    %v327 = vcosq.f32.pop %v325
    %v328 = vsinq.f32.pop %v325
    %vm329 = vweird.f32 %v133
    %v330 = vand.u32 %v326, 3
    %vm331 = vcmp.lt.s32.totalorder %v330, 2
    %vm332 = vcmp.eq.s32.totalorder %v330, 0
    %v333 = vxor.u32 %v328, 2147483648
    %v334 = vsel %vm332, %v327, %v333
    %vm335 = vcmp.eq.s32.totalorder %v330, 2
    %v336 = vxor.u32 %v327, 2147483648
    %v337 = vsel %vm335, %v336, %v328
    %v338 = vsel %vm331, %v334, %v337
    %v339 = vsel %vm329, nan, %v338
    %v340 = vmul.f32 %v124, %v236
    %v341 = vmul.f32 %v131, %v339
    %v342 = vmul.f32 %v340, 0.05
    %v343 = vmul.f32 %v341, 0.05
    %v344 = vld [vmem:[#allocation4] sm:$0xff]
    %v345 = vld [vmem:[#allocation4 + $0x8] sm:$0xff]
    %v346 = vadd.f32 %v344, %v342
    %v347 = vadd.f32 %v345, %v343
    %348 = vst [vmem:[#allocation7] sm:$0xff] %v346
    %349 = vst [vmem:[#allocation7 + $0x8] sm:$0xff] %v347
    // Predicated region
    $region10: #{tpu_custom_call.1} parent=1 // pred_check
      _
    $region11: #{tpu_custom_call.1} parent=1 // pred_check_branch
      %351 = sbr.rel (0) target = $region13
    $region12: #{tpu_custom_call.1} parent=1 // pred_region
      %s353 = ssub.s32 256, 256
      %354 = vsyncadd [#allocation6], %s353
      %s355 = sshll.u32 [#allocation7], 4
      %s356 = int_to_ptr.vmem [resolvable:$true] %s355
      %361 = dma.vmem_to_hbm [thread:$0]  %s356, 256, %s2, [#allocation6], 128, 128, 8
    $region13: #{tpu_custom_call.1} parent=1 // pred_fallthru
      _
    // Predicated region
    $region14: #{tpu_custom_call.1} parent=1 // pred_check
      _
    $region15: #{tpu_custom_call.1} parent=1 // pred_check_branch
      %363 = sbr.rel (0) target = $region17
    $region16: #{tpu_custom_call.1} parent=1 // pred_region
      %364 = dma.done [#allocation6], 256
    $region17: #{tpu_custom_call.1} parent=1 // pred_fallthru
      _
    %365 = vsyncpa [#allocation5], 1
    %366 = vsyncpa [#allocation6], 1

</llo_original>
